<compile_context>
chip_gen: v7x
topology: tpu7x:2x2x1
jax: 0.10.0
libtpu: 0.0.40
codegen_flags: <defaults>
</compile_context>

<pallas_src>
import jax
import jax.numpy as jnp
from jax.experimental import pallas as pl
from jax.experimental.pallas import tpu as pltpu


def _concat_kernel(x_ref, o_ref):
    # x_ref: (N, C, THW) block in VMEM ; o_ref: (N, 2C+1, THW) block in VMEM
    C = x_ref.shape[1]
    v = x_ref[...]                              # read input block once
    o_ref[:, 0:C, :] = v                        # first copy of x
    o_ref[:, C:2 * C, :] = v                    # second copy of x
    o_ref[:, 2 * C:2 * C + 1, :] = v[:, C - 1:C, :]  # appended last channel


def _pick_spatial_tile(hw, n, c, dtype_bytes, target_steps=4):
    """Lane-dense spatial tile: multiple of 128, VMEM-aware, ~target_steps steps."""
    if hw <= 128:
        # Full last dim: block dim == array dim satisfies the layout rule.
        return hw
    # VMEM budget for the double-buffered (input + output) blocks.
    try:
        phys_vmem = pltpu.get_tpu_info().vmem_capacity_bytes
    except Exception:  # conservative fallback (v7x per-TC physical VMEM)
        phys_vmem = 64 << 20
    budget = min(phys_vmem // 4, 16 << 20)      # stays under default scoped VMEM
    per_lane = n * (3 * c + 1) * dtype_bytes * 2  # in+out block bytes per lane, x2 buffers
    max_thw = max(128, (budget // per_lane) // 128 * 128)
    hw_pad = pl.cdiv(hw, 128) * 128
    thw = pl.cdiv(pl.cdiv(hw, target_steps), 128) * 128
    return min(thw, max_thw, hw_pad)


def model_forward(x):
    """x: (N, C, H, W) -> (N, 2C+1, H, W), same semantics as the torch Model."""
    N, C, H, W = x.shape
    HW = H * W
    x3 = x.reshape(N, C, HW)                    # free view: lane-dense last dim
    dtype_bytes = jnp.dtype(x.dtype).itemsize
    thw = _pick_spatial_tile(HW, N, C, dtype_bytes)
    grid = (pl.cdiv(HW, thw),)                  # ragged last block handled by masking
    bytes_accessed = N * (3 * C + 1) * HW * dtype_bytes  # read once + write once

    out3 = pl.pallas_call(
        _concat_kernel,
        out_shape=jax.ShapeDtypeStruct((N, 2 * C + 1, HW), x.dtype),
        grid=grid,
        in_specs=[pl.BlockSpec((N, C, thw), lambda i: (0, 0, i))],
        out_specs=pl.BlockSpec((N, 2 * C + 1, thw), lambda i: (0, 0, i)),
        compiler_params=pltpu.CompilerParams(
            dimension_semantics=("parallel",)),
        cost_estimate=pl.CostEstimate(
            flops=0, transcendentals=0, bytes_accessed=bytes_accessed),
    )(x3)
    return out3.reshape(N, 2 * C + 1, H, W)


if __name__ == "__main__":
    key = jax.random.PRNGKey(0)
    # Small NCHW shape consistent with the module's (1, 250, 64, 64) input.
    x = jax.random.normal(key, (2, 4, 16, 16), dtype=jnp.float32)

    out = jax.block_until_ready(model_forward(x))

    # Reference (plain JAX): cat([x, x], 1) then append last channel.
    t1 = jnp.concatenate([x, x], axis=1)
    t3 = t1[:, -1:][:, :250]
    ref = jnp.concatenate([t1, t3], axis=1)

    assert out.shape == ref.shape, (out.shape, ref.shape)
    assert jnp.allclose(out, ref), "mismatch vs reference"
    print("KERNEL_OK")
</pallas_src>

<mosaic_0001>
module attributes {stable_mosaic.version = 11 : i64} {
  func.func @_concat_kernel(%arg0: i32, %arg1: memref<2x4x128xf32, #tpu.memory_space<vmem>>, %arg2: memref<2x9x128xf32, #tpu.memory_space<vmem>>) attributes {dimension_semantics = [#tpu.dimension_semantics<parallel>], iteration_bounds = array<i64: 2>, scalar_prefetch = 0 : i64, scratch_operands = 0 : i64, tpu.core_type = #tpu.core_type<tc>, window_params = [{transform_indices = @transform_0, window_bounds = array<i64: 2, 4, 128>}, {transform_indices = @transform_1, window_bounds = array<i64: 2, 9, 128>}]} {
    %c0 = arith.constant 0 : index
    %c0_0 = arith.constant 0 : index
    %c0_1 = arith.constant 0 : index
    %0 = vector.load %arg1[%c0, %c0_0, %c0_1] : memref<2x4x128xf32, #tpu.memory_space<vmem>>, vector<2x4x128xf32>
    %c0_2 = arith.constant 0 : index
    %c0_3 = arith.constant 0 : index
    %c0_4 = arith.constant 0 : index
    %1 = vector.load %arg2[%c0_2, %c0_3, %c0_4] : memref<2x9x128xf32, #tpu.memory_space<vmem>>, vector<2x4x128xf32>
    tpu.vector_store %arg2[%c0_2, %c0_3, %c0_4], %0 {strides = array<i32>} : memref<2x9x128xf32, #tpu.memory_space<vmem>>, vector<2x4x128xf32>,
    %c0_5 = arith.constant 0 : index
    %c4 = arith.constant 4 : index
    %c0_6 = arith.constant 0 : index
    %2 = vector.load %arg2[%c0_5, %c4, %c0_6] : memref<2x9x128xf32, #tpu.memory_space<vmem>>, vector<2x4x128xf32>
    tpu.vector_store %arg2[%c0_5, %c4, %c0_6], %0 {strides = array<i32>} : memref<2x9x128xf32, #tpu.memory_space<vmem>>, vector<2x4x128xf32>,
    %3 = vector.extract_strided_slice %0 {offsets = [0, 3, 0], sizes = [2, 1, 128], strides = [1, 1, 1]} : vector<2x4x128xf32> to vector<2x1x128xf32>
    %c0_7 = arith.constant 0 : index
    %c8 = arith.constant 8 : index
    %c0_8 = arith.constant 0 : index
    %4 = vector.load %arg2[%c0_7, %c8, %c0_8] : memref<2x9x128xf32, #tpu.memory_space<vmem>>, vector<2x1x128xf32>
    tpu.vector_store %arg2[%c0_7, %c8, %c0_8], %3 {strides = array<i32>} : memref<2x9x128xf32, #tpu.memory_space<vmem>>, vector<2x1x128xf32>,
    return
  }
  func.func @transform_0(%arg0: i32) -> (i32, i32, i32) {
    %c0_i32 = arith.constant 0 : i32
    %c0_i32_0 = arith.constant 0 : i32
    %c0_i32_1 = arith.constant 0 : i32
    return %c0_i32, %c0_i32_0, %arg0 : i32, i32, i32
  }
  func.func @transform_1(%arg0: i32) -> (i32, i32, i32) {
    %c0_i32 = arith.constant 0 : i32
    %c0_i32_0 = arith.constant 0 : i32
    %c0_i32_1 = arith.constant 0 : i32
    return %c0_i32, %c0_i32_0, %arg0 : i32, i32, i32
  }
}

</mosaic_0001>

<llo_original>
// kernel: tpu_custom_call.1
$region0: #{tpu_custom_call.1}
  #allocation0 [shape = 'u32[]', space=smem, size = 0x4, offset = 0x4, fixed_abs, tag = 'smem constant byte address 0x4 - core index']
  #allocation1 [shape = 'u32[144,128]{1,0:T(1,128)}', space=vmem, size = 0x12000, scoped, tag = 'internal scratch']
  %s0 = inlined_call_operand.hbm [shape: f32[2,4,256], index: 0, kind: input, shape index: {}]
  %s1 = inlined_call_operand.vmem [shape: f32[2,9,256], index: 1, kind: output, shape index: {}]
  %s2 = sld [smem:[#allocation0]]
  $region75: #{tpu_custom_call.1} parent=0
    _
  %s4 = ssub.s32 1, %s2
  %s5 = scalar_select 0, %s4, %s2
  $region1: #{tpu_custom_call.1} parent=0
    #allocation2 [shape = 'u8[8192]{0}', space=vmem, size = 0x2000, scoped, tag = 'input window, operand 0']
    #allocation3 [shape = 's32[2]{0}', space=sflag, size = 0x8, scoped, tag = 'scoped memory for tpu_custom_call.1']
    #allocation4 [shape = 'u8[32768]{0}', space=vmem, size = 0x8000, scoped, tag = 'output window, operand 0']
    %6 = vsyncpa [#allocation3], 0
    %s7 = scalar_lea.sflag [#allocation3], 1
    %8 = vsyncpa %s7, 0
    loop: start=0, step=1, limit=4
    $region2: #{tpu_custom_call.1} parent=1 // loop_pre_header
      _
    $region3: #{tpu_custom_call.1} parent=1 // loop_header
      %s10 = sphi 0, %s14
      %p11 = scmp.ge.s32.totalorder %s10, 4
      %s20 = sphi 0, %s22
      %s23 = sphi 0, %s20
      %s24 = sphi 0, %s23
      %s40 = sphi 0, %s24
      %s46 = sphi 0, %s48
      %s49 = sphi 0, %s46
      %s50 = sphi 0, %s49
      %s66 = sphi 0, %s50
    $region4: #{tpu_custom_call.1} parent=1 // loop_header_branch
      %13 = sbr.rel (%p11) target = $region8
    $region5: #{tpu_custom_call.1} parent=1 // loop_body
      %s15 = ssub.s32 %s10, 1
      %s16 = ssub.s32 %s10, 2
      %s17 = sadd.s32 %s10, 1
      %s18 = ssub.s32 %s10, %s17
      %p19 = scmp.eq.s32.totalorder %s18, 0
      %s21 = sadd.s32 %s20, 1
      %s22 = scalar_select %p19, %s20, %s21
      %p25 = pneg %p19
      %p26 = scmp.eq.s32.totalorder %s10, 1
      %p27 = por %p25, %p26
      %p28 = scmp.ne.s32.totalorder %s20, %s23
      %p29 = scmp.eq.s32.totalorder %s10, 0
      %p30 = por %p28, %p29
      %p31 = scmp.ne.s32.totalorder %s20, %s23
      %p32 = scmp.eq.s32.totalorder %s15, 1
      %p33 = por %p31, %p32
      %p34 = scmp.ne.s32.totalorder %s23, %s24
      %p35 = scmp.eq.s32.totalorder %s15, 0
      %p36 = por %p34, %p35
      %p37 = scmp.ne.s32.totalorder %s23, %s24
      %p38 = scmp.eq.s32.totalorder %s16, 1
      %p39 = por %p37, %p38
      %p41 = scmp.ne.s32.totalorder %s24, %s40
      %p42 = scmp.eq.s32.totalorder %s16, 0
      %p43 = por %p41, %p42
      %s44 = ssub.s32 %s10, %s17
      %p45 = scmp.eq.s32.totalorder %s44, 0
      %s47 = sadd.s32 %s46, 1
      %s48 = scalar_select %p45, %s46, %s47
      %p51 = pneg %p45
      %p52 = scmp.eq.s32.totalorder %s10, 1
      %p53 = por %p51, %p52
      %p54 = scmp.ne.s32.totalorder %s46, %s49
      %p55 = scmp.eq.s32.totalorder %s10, 0
      %p56 = por %p54, %p55
      %p57 = scmp.ne.s32.totalorder %s46, %s49
      %p58 = scmp.eq.s32.totalorder %s15, 1
      %p59 = por %p57, %p58
      %p60 = scmp.ne.s32.totalorder %s49, %s50
      %p61 = scmp.eq.s32.totalorder %s15, 0
      %p62 = por %p60, %p61
      %p63 = scmp.ne.s32.totalorder %s49, %s50
      %p64 = scmp.eq.s32.totalorder %s16, 1
      %p65 = por %p63, %p64
      %p67 = scmp.ne.s32.totalorder %s50, %s66
      %p68 = scmp.eq.s32.totalorder %s16, 0
      %p69 = por %p67, %p68
      %p70 = scmp.le.s32.totalorder 1, %s10
      %p71 = scmp.lt.s32.totalorder %s10, 3
      %p72 = pnand %p70, %p71
      %p73 = pneg %p72
      // Predicated region
      $region9: #{tpu_custom_call.1} parent=5 // pred_check
        _
      $region10: #{tpu_custom_call.1} parent=5 // pred_check_branch
        %75 = sbr.rel (%p72) target = $region12
      $region11: #{tpu_custom_call.1} parent=5 // pred_region
        %s76 = ssub.s32 %s10, 1
      $region12: #{tpu_custom_call.1} parent=5 // pred_fallthru
        _
      %p77 = scmp.lt.s32.totalorder %s10, 2
      // Predicated region
      $region13: #{tpu_custom_call.1} parent=5 // pred_check
        %p78 = pneg %p77
      $region14: #{tpu_custom_call.1} parent=5 // pred_check_branch
        %80 = sbr.rel (%p78) target = $region16
      $region15: #{tpu_custom_call.1} parent=5 // pred_region
        // Predicated region
        $region17: #{tpu_custom_call.1} parent=15 // pred_check
          %p81 = pneg %p30
        $region18: #{tpu_custom_call.1} parent=15 // pred_check_branch
          %83 = sbr.rel (%p81) target = $region20
        $region19: #{tpu_custom_call.1} parent=15 // pred_region
          %s84 = sand.u32 %s20, 1
          %s85 = scalar_lea.sflag [#allocation3], %s84
          %s86 = sand.u32 %s20, 1
          %s87 = smul.addr %s86, 8
          %s88 = scalar_lea.vmem [#allocation2], %s87
          %s90 = ssub.s32 128, 128
          %91 = vsyncadd %s85, %s90
          %s92 = smul.addr %s10, 64
          %s93 = scalar_lea.hbm %s0, %s92
          %s94 = sshll.u32 %s88, 4
          %s95 = int_to_ptr.vmem [resolvable:$true] %s94
          %100 = dma.hbm_to_vmem [thread:$0]  %s93, 128, %s95, %s85, 128, 64, 4
        $region20: #{tpu_custom_call.1} parent=15 // pred_fallthru
          _
      $region16: #{tpu_custom_call.1} parent=5 // pred_fallthru
        _
      %p101 = scmp.le.s32.totalorder 1, %s10
      %p102 = scmp.lt.s32.totalorder %s10, 3
      %p103 = pnand %p101, %p102
      %p104 = pneg %p103
      // Predicated region
      $region21: #{tpu_custom_call.1} parent=5 // pred_check
        _
      $region22: #{tpu_custom_call.1} parent=5 // pred_check_branch
        %106 = sbr.rel (%p103) target = $region24
      $region23: #{tpu_custom_call.1} parent=5 // pred_region
        %s107 = ssub.s32 %s10, 1
        %s108 = sand.u32 %s23, 1
        %s109 = scalar_lea.sflag [#allocation3], %s108
        %s110 = sand.u32 %s23, 1
        %s111 = smul.addr %s110, 8
        %s112 = scalar_lea.vmem [#allocation2], %s111
        // Predicated region
        $region25: #{tpu_custom_call.1} parent=23 // pred_check
          %p113 = pneg %p36
        $region26: #{tpu_custom_call.1} parent=23 // pred_check_branch
          %115 = sbr.rel (%p113) target = $region28
        $region27: #{tpu_custom_call.1} parent=23 // pred_region
          %116 = dma.done %s109, 128
        $region28: #{tpu_custom_call.1} parent=23 // pred_fallthru
          _
        %s117 = sand.u32 %s23, 1
        %s118 = scalar_lea.sflag [#allocation3], %s117
        %s119 = sand.u32 %s23, 1
        %s120 = smul.addr %s119, 8
        %s121 = scalar_lea.vmem [#allocation2], %s120
        %p122 = pneg %p36
        %p123 = pneg %p33
        %p124 = pneg %p62
        %p125 = pneg %p59
        %s126 = sand.u32 %s49, 1
        %s127 = sand.u32 %s49, 1
        %s128 = smul.addr %s127, 32
        %s129 = scalar_lea.vmem [#allocation4], %s128
        %v130 = vld [vmem:[%s112] sm:$0xf]
        %v131 = vld [vmem:[%s112 + $0x4] sm:$0xf]
        %132 = vst [vmem:[%s129] sm:$0xf] %v130
        %133 = vst [vmem:[%s129 + $0x10] sm:$0xf] %v131
        %134 = vst [vmem:[%s129 + $0x4] sm:$0xf] %v130
        %135 = vst [vmem:[%s129 + $0x14] sm:$0xf] %v131
        %136 = vst [vmem:[%s129 + $0x5] sm:$0x8] %v130
        %137 = vst [vmem:[%s129 + $0x15] sm:$0x8] %v131
        %s138 = sand.u32 %s49, 1
        %s139 = sand.u32 %s49, 1
        %s140 = smul.addr %s139, 32
        %s141 = scalar_lea.vmem [#allocation4], %s140
        // Predicated region
        $region29: #{tpu_custom_call.1} parent=23 // pred_check
          %p142 = pneg %p59
        $region30: #{tpu_custom_call.1} parent=23 // pred_check_branch
          %144 = sbr.rel (%p142) target = $region32
        $region31: #{tpu_custom_call.1} parent=23 // pred_region
          %s145 = smul.addr %s15, 8
          %s146 = scalar_lea.vmem %s1, %s145
          // Predicated region
          $region33: #{tpu_custom_call.1} parent=31 // pred_check
            _
          $region34: #{tpu_custom_call.1} parent=31 // pred_check_branch
            %148 = sbr.rel (0) target = $region36
          $region35: #{tpu_custom_call.1} parent=31 // pred_region
            // Predicated region
            $region37: #{tpu_custom_call.1} parent=35 // pred_check
              _
            $region38: #{tpu_custom_call.1} parent=35 // pred_check_branch
              %150 = sbr.rel (0) target = $region40
            $region39: #{tpu_custom_call.1} parent=35 // pred_region
              // Predicated region
              $region52: #{tpu_custom_call.1} parent=39 // pred_check
                _
              $region53: #{tpu_custom_call.1} parent=39 // pred_check_branch
                %171 = sbr.rel (0) target = $region55
              $region54: #{tpu_custom_call.1} parent=39 // pred_region
                loop: start=0, step=1, limit=1
                $region56: #{tpu_custom_call.1} parent=54 // loop_pre_header
                  _
                $region57: #{tpu_custom_call.1} parent=54 // loop_header
                  %s173 = sphi 0, %s177
                  %p174 = scmp.ge.s32.totalorder %s173, 1
                  %s178 = sphi %s141, %s141
                  %s179 = sphi %s146, %s146
                $region58: #{tpu_custom_call.1} parent=54 // loop_header_branch
                  %176 = sbr.rel (%p174) target = $region62
                $region59: #{tpu_custom_call.1} parent=54 // loop_body
                  %v180 = vld [vmem:[%s178] sm:$0xff]
                  %181 = vst [vmem:[%s179] sm:$0xff] %v180
                  %v182 = vld [vmem:[%s178 + $0x8] sm:$0xff]
                  %183 = vst [vmem:[%s179 + $0x10] sm:$0xff] %v182
                  %v184 = vld [vmem:[%s178 + $0x10] sm:$0xff]
                  %185 = vst [vmem:[%s179 + $0x20] sm:$0xff] %v184
                  %v186 = vld [vmem:[%s178 + $0x18] sm:$0xff]
                  %187 = vst [vmem:[%s179 + $0x30] sm:$0xff] %v186
                $region60: #{tpu_custom_call.1} parent=54 // loop_footer
                  %s177 = sadd.s32 1, %s173
                $region61: #{tpu_custom_call.1} parent=54 // loop_footer_branch
                  %172 = sbr.rel target = $region57
                $region62: #{tpu_custom_call.1} parent=54 // loop_exit
                  _
              $region55: #{tpu_custom_call.1} parent=39 // pred_fallthru
                _
              // Predicated region
              $region63: #{tpu_custom_call.1} parent=39 // pred_check
                _
              $region64: #{tpu_custom_call.1} parent=39 // pred_check_branch
                %189 = sbr.rel target = $region66
              $region65: #{tpu_custom_call.1} parent=39 // pred_region
                _
              $region66: #{tpu_custom_call.1} parent=39 // pred_fallthru
                _
            $region40: #{tpu_custom_call.1} parent=35 // pred_fallthru
              _
            // Predicated region
            $region41: #{tpu_custom_call.1} parent=35 // pred_check
              _
            $region42: #{tpu_custom_call.1} parent=35 // pred_check_branch
              %152 = sbr.rel target = $region44
            $region43: #{tpu_custom_call.1} parent=35 // pred_region
              loop: start=0, step=1, limit=1
              $region45: #{tpu_custom_call.1} parent=43 // loop_pre_header
                _
              $region46: #{tpu_custom_call.1} parent=43 // loop_header
                %s155 = sphi 0, %s159
                %p156 = scmp.ge.s32.totalorder %s155, 1
                %s160 = sphi %s141, %s141
                %s161 = sphi %s146, %s146
              $region47: #{tpu_custom_call.1} parent=43 // loop_header_branch
                %158 = sbr.rel (%p156) target = $region51
              $region48: #{tpu_custom_call.1} parent=43 // loop_body
                %v162 = vld [vmem:[%s160] sm:$0xff]
                %163 = vst [vmem:[%s161] sm:$0xff] %v162
                %v164 = vld [vmem:[%s160 + $0x8] sm:$0xff]
                %165 = vst [vmem:[%s161 + $0x10] sm:$0xff] %v164
                %v166 = vld [vmem:[%s160 + $0x10] sm:$0xff]
                %167 = vst [vmem:[%s161 + $0x20] sm:$0xff] %v166
                %v168 = vld [vmem:[%s160 + $0x18] sm:$0xff]
                %169 = vst [vmem:[%s161 + $0x30] sm:$0xff] %v168
              $region49: #{tpu_custom_call.1} parent=43 // loop_footer
                %s159 = sadd.s32 1, %s155
              $region50: #{tpu_custom_call.1} parent=43 // loop_footer_branch
                %154 = sbr.rel target = $region46
              $region51: #{tpu_custom_call.1} parent=43 // loop_exit
                _
            $region44: #{tpu_custom_call.1} parent=35 // pred_fallthru
              _
          $region36: #{tpu_custom_call.1} parent=31 // pred_fallthru
            _
          %190 = vnop
        $region32: #{tpu_custom_call.1} parent=23 // pred_fallthru
          _
      $region24: #{tpu_custom_call.1} parent=5 // pred_fallthru
        _
      %p191 = scmp.le.s32.totalorder 2, %s10
      // Predicated region
      $region67: #{tpu_custom_call.1} parent=5 // pred_check
        %p192 = pneg %p191
      $region68: #{tpu_custom_call.1} parent=5 // pred_check_branch
        %194 = sbr.rel (%p192) target = $region70
      $region69: #{tpu_custom_call.1} parent=5 // pred_region
        %s195 = ssub.s32 %s10, 2
        // Predicated region
        $region71: #{tpu_custom_call.1} parent=69 // pred_check
          %p196 = pneg %p65
        $region72: #{tpu_custom_call.1} parent=69 // pred_check_branch
          %198 = sbr.rel (%p196) target = $region74
        $region73: #{tpu_custom_call.1} parent=69 // pred_region
          %s199 = sand.u32 %s50, 1
          %s200 = sand.u32 %s50, 1
          %s201 = smul.addr %s200, 32
          %s202 = scalar_lea.vmem [#allocation4], %s201
        $region74: #{tpu_custom_call.1} parent=69 // pred_fallthru
          _
      $region70: #{tpu_custom_call.1} parent=5 // pred_fallthru
        _
    $region6: #{tpu_custom_call.1} parent=1 // loop_footer
      %s14 = sadd.s32 1, %s10
    $region7: #{tpu_custom_call.1} parent=1 // loop_footer_branch
      %9 = sbr.rel target = $region3
    $region8: #{tpu_custom_call.1} parent=1 // loop_exit
      _
    %203 = vsyncpa [#allocation3], 1
    %s204 = scalar_lea.sflag [#allocation3], 1
    %205 = vsyncpa %s204, 1

</llo_original>
